<compile_context>
chip_gen: v7x
topology: tpu7x:2x2x1
jax: 0.10.0
libtpu: 0.0.40
codegen_flags: <defaults>
</compile_context>

<pallas_src>
import functools

import jax
import jax.numpy as jnp
from jax import lax
from jax.experimental import pallas as pl
from jax.experimental.pallas import tpu as pltpu

# ---- model config (mirrors the PyTorch script) -----------------------------
VOCAB_SIZE = 1000
EMB_SIZE = 128
NB_CLASSES = 3
CONV_INS = (128, 64)
CONV_OUTS = (64, 32)
CONV_K = (3, 3)
POOL_K = 3
POOL_S = 2
LANES = 128            # conv2 / logits are lane-padded to 128 for dense stores
MAX_BATCH_CHUNK = 32   # batch rows folded into one grid step / matmul M dim


def _round_up(x, m):
    return ((x + m - 1) // m) * m


def _cdiv(a, b):
    return (a + b - 1) // b


def _pick_batch_chunk(b):
    """Batch rows per grid step.

    * B <= 8: one chunk, block == full array (tiny problem, no padding).
    * B  > 8: chunk is a multiple of 8 (sublane-aligned output store), capped
      at MAX_BATCH_CHUNK, and chosen so the grid has >= 2 chunks so v7x can
      shard the "parallel" axis across both TensorCores.
    """
    if b <= 8:
        return b
    n_chunks = max(2, _cdiv(b, MAX_BATCH_CHUNK))
    return min(MAX_BATCH_CHUNK, _round_up(_cdiv(b, n_chunks), 8))


def cnn1d_kernel(x_ref,                 # (bb, L1_pad+2, EMB) bf16  (padded time)
                 w1_ref, b1_ref,        # (3*EMB, 64) bf16, (1, 64) f32
                 w2_ref, b2_ref,        # (3*64, 128) bf16 (lane-padded), (1, 128) f32
                 wl_ref, bl_ref,        # (128, 128) f32 (padded), (1, 128) f32
                 out_ref,               # (bb, 128) f32
                 h1_scr,                # VMEM (bb, L1_pad, 64) f32
                 p1_scr,                # VMEM (bb, L2_pad+2, 64) f32
                 *, bb, l1_pad, lp, l2, l2_pad, lp_s):
    """One batch chunk (bb rows) per grid step; grid = (B_pad // bb,)."""

    # --- Conv1d(128 -> 64, k=3): im2col over the 8-aligned padded time axis ---
    # Reshape (bb, l1_pad, 384) -> (bb*l1_pad, 384) is a layout-preserving
    # leading-dim merge because l1_pad is a multiple of 8.
    xcat = jnp.concatenate(
        [x_ref[:, k:k + l1_pad, :] for k in range(CONV_K[0])], axis=-1)
    h1 = jnp.dot(xcat.reshape(bb * l1_pad, CONV_K[0] * EMB_SIZE), w1_ref[...],
                 preferred_element_type=jnp.float32) + b1_ref[...]
    h1_scr[...] = h1.reshape(bb, l1_pad, CONV_OUTS[0])

    # --- MaxPool1d(k=3, s=2): two VPU maxima over three stride-2 sublane reads
    # (f32 path; valid windows only read valid conv1 rows).
    p1 = jnp.maximum(
        jnp.maximum(h1_scr[:, pl.ds(0, lp, stride=POOL_S), :],
                    h1_scr[:, pl.ds(1, lp, stride=POOL_S), :]),
        h1_scr[:, pl.ds(2, lp, stride=POOL_S), :])             # (bb, lp, 64)
    p1_scr[:, 0:lp, :] = p1
    if lp_s > lp:   # zero the pad rows so the padded conv2 rows are benign
        p1_scr[:, lp:lp_s, :] = jnp.zeros((bb, lp_s - lp, CONV_OUTS[0]),
                                          jnp.float32)

    # --- Conv1d(64 -> 32, k=3), output channels lane-padded to 128 ------------
    # Reshape (bb, l2_pad, 192) -> (bb*l2_pad, 192) is layout-preserving
    # (l2_pad is a multiple of 8).
    pcat = jnp.concatenate(
        [p1_scr[:, k:k + l2_pad, :] for k in range(CONV_K[1])],
        axis=-1).astype(jnp.bfloat16)                          # (bb, l2_pad, 192)
    h2 = jnp.dot(pcat.reshape(bb * l2_pad, CONV_K[1] * CONV_OUTS[0]), w2_ref[...],
                 preferred_element_type=jnp.float32) + b2_ref[...]  # (bb*l2_pad, 128)

    # --- global max over the valid time steps, lane-padded Linear (f32) -------
    g = jnp.max(h2.reshape(bb, l2_pad, LANES)[:, :l2, :], axis=1)    # (bb, 128)
    out_ref[...] = jnp.dot(g, wl_ref[...],
                           preferred_element_type=jnp.float32) + bl_ref[...]


def cnn1d_forward(tokens, params):
    B, L = tokens.shape
    assert L >= 9, "sequence too short for Conv(3) -> MaxPool(3,2) -> Conv(3)"

    # static shape math (same as the PyTorch module)
    L1 = L - CONV_K[0] + 1                 # conv1 output length
    Lp = (L1 - POOL_K) // POOL_S + 1       # pool output length
    L2 = Lp - CONV_K[1] + 1                # conv2 output length
    L1_pad = _round_up(L1, 8)              # 8-aligned time for conv1 matmul M dim
    L2_pad = _round_up(L2, 8)              # 8-aligned time for conv2 matmul M dim
    L_x = L1_pad + CONV_K[0] - 1           # padded input time (>= L)
    Lp_s = L2_pad + CONV_K[1] - 1          # pool-scratch rows (zero-padded tail)

    bb = _pick_batch_chunk(B)
    n_chunks = _cdiv(B, bb)
    B_pad = n_chunks * bb

    # Embedding gather stays in XLA (review: the in-kernel scalar gather was the
    # bottleneck); cast to bf16 so the activation DMA and conv1 LHS are half-width.
    x = params["emb"][tokens.astype(jnp.int32)].astype(jnp.bfloat16)  # (B, L, 128)
    x = jnp.pad(x, ((0, B_pad - B), (0, L_x - L), (0, 0)))            # (B_pad, L_x, 128)

    # Pre-concatenated im2col weights (bf16 for the MXU); conv2 / linear head
    # lane-padded so all late-stage tensors and the output store are lane-dense.
    w1cat = params["w1"].reshape(CONV_K[0] * CONV_INS[0],
                                 CONV_OUTS[0]).astype(jnp.bfloat16)       # (384, 64)
    b1_2d = params["b1"].reshape(1, CONV_OUTS[0]).astype(jnp.float32)
    w2cat = jnp.zeros((CONV_K[1] * CONV_INS[1], LANES), jnp.float32)
    w2cat = w2cat.at[:, :CONV_OUTS[1]].set(
        params["w2"].reshape(CONV_K[1] * CONV_INS[1], CONV_OUTS[1]))
    w2cat = w2cat.astype(jnp.bfloat16)                                    # (192, 128)
    b2_2d = jnp.zeros((1, LANES), jnp.float32).at[0, :CONV_OUTS[1]].set(params["b2"])
    wl_pad = jnp.zeros((LANES, LANES), jnp.float32).at[
        :CONV_OUTS[1], :NB_CLASSES].set(params["wl"])                     # (128, 128)
    bl_pad = jnp.zeros((1, LANES), jnp.float32).at[0, :NB_CLASSES].set(params["bl"])

    kernel = functools.partial(cnn1d_kernel, bb=bb, l1_pad=L1_pad, lp=Lp,
                               l2=L2, l2_pad=L2_pad, lp_s=Lp_s)

    out_padded = pl.pallas_call(
        kernel,
        out_shape=jax.ShapeDtypeStruct((B_pad, LANES), jnp.float32),
        grid_spec=pltpu.PrefetchScalarGridSpec(
            num_scalar_prefetch=0,
            grid=(n_chunks,),
            in_specs=[
                pl.BlockSpec((bb, L_x, EMB_SIZE), lambda g: (g, 0, 0)),   # activations
                pl.BlockSpec(w1cat.shape, lambda g: (0, 0)),              # conv1 W
                pl.BlockSpec(b1_2d.shape, lambda g: (0, 0)),              # conv1 b
                pl.BlockSpec(w2cat.shape, lambda g: (0, 0)),              # conv2 W (padded)
                pl.BlockSpec(b2_2d.shape, lambda g: (0, 0)),              # conv2 b (padded)
                pl.BlockSpec(wl_pad.shape, lambda g: (0, 0)),             # linear W (padded)
                pl.BlockSpec(bl_pad.shape, lambda g: (0, 0)),             # linear b (padded)
            ],
            out_specs=pl.BlockSpec((bb, LANES), lambda g: (g, 0)),
            scratch_shapes=[
                pltpu.VMEM((bb, L1_pad, CONV_OUTS[0]), jnp.float32),  # conv1 out (pool src)
                pltpu.VMEM((bb, Lp_s, CONV_OUTS[0]), jnp.float32),    # pool out, zero-padded
            ],
        ),
        compiler_params=pltpu.CompilerParams(
            dimension_semantics=("parallel",),          # disjoint chunks -> v7x 2 TCs
            vmem_limit_bytes=32 * 1024 * 1024),
    )(x, w1cat, b1_2d, w2cat, b2_2d, wl_pad, bl_pad)

    return out_padded[:B, :NB_CLASSES]


def ref_forward(tokens, params):
    """Pure-JAX f32 reference with identical semantics (channels-last)."""
    x = params["emb"][tokens]                                     # (B, L, E)
    h1 = lax.conv_general_dilated(
        x, params["w1"], window_strides=(1,), padding="VALID",
        dimension_numbers=("NWC", "WIO", "NWC")) + params["b1"]
    p1 = lax.reduce_window(
        h1, -jnp.inf, lax.max,
        window_dimensions=(1, POOL_K, 1),
        window_strides=(1, POOL_S, 1),
        padding="VALID")
    h2 = lax.conv_general_dilated(
        p1, params["w2"], window_strides=(1,), padding="VALID",
        dimension_numbers=("NWC", "WIO", "NWC")) + params["b2"]
    g = jnp.max(h2, axis=1)                                       # (B, 32)
    return g @ params["wl"] + params["bl"]                        # (B, 3)


if __name__ == "__main__":
    key = jax.random.PRNGKey(0)
    ks = jax.random.split(key, 8)
    B, L = 2, 16  # batch=2, seq=16 -> conv1: 14 -> pool: 6 -> conv2: 4

    params = dict(
        emb=jax.random.normal(ks[0], (VOCAB_SIZE, EMB_SIZE), jnp.float32) * 0.1,
        # conv weights stored as (K, Cin, Cout) == torch (Cout, Cin, K).permute(2,1,0)
        w1=jax.random.normal(ks[1], (CONV_K[0], CONV_INS[0], CONV_OUTS[0]),
                             jnp.float32) * 0.05,
        b1=jax.random.normal(ks[2], (CONV_OUTS[0],), jnp.float32) * 0.05,
        w2=jax.random.normal(ks[3], (CONV_K[1], CONV_INS[1], CONV_OUTS[1]),
                             jnp.float32) * 0.05,
        b2=jax.random.normal(ks[4], (CONV_OUTS[1],), jnp.float32) * 0.05,
        # linear stored as (in, out) == torch weight.T
        wl=jax.random.normal(ks[5], (CONV_OUTS[1], NB_CLASSES), jnp.float32) * 0.05,
        bl=jax.random.normal(ks[6], (NB_CLASSES,), jnp.float32) * 0.05,
    )
    tokens = jax.random.randint(ks[7], (B, L), 0, VOCAB_SIZE, dtype=jnp.int32)

    out = jax.block_until_ready(cnn1d_forward(tokens, params))
    ref = ref_forward(tokens, params)

    assert out.shape == (B, NB_CLASSES), out.shape
    # Conv inputs/weights run in bf16 on the MXU (f32 accumulation), so the
    # tolerance is bf16-level rather than the f32-level 2e-4 used previously.
    assert jnp.allclose(out, ref, rtol=2e-2, atol=2e-2), (out, ref)
    print("KERNEL_OK")
</pallas_src>

<mosaic_0001>
module attributes {stable_mosaic.version = 11 : i64} {
  func.func @cnn1d_kernel(%arg0: i32, %arg1: memref<2x18x128xbf16, #tpu.memory_space<vmem>>, %arg2: memref<384x64xbf16, #tpu.memory_space<vmem>>, %arg3: memref<1x64xf32, #tpu.memory_space<vmem>>, %arg4: memref<192x128xbf16, #tpu.memory_space<vmem>>, %arg5: memref<1x128xf32, #tpu.memory_space<vmem>>, %arg6: memref<128x128xf32, #tpu.memory_space<vmem>>, %arg7: memref<1x128xf32, #tpu.memory_space<vmem>>, %arg8: memref<2x128xf32, #tpu.memory_space<vmem>>, %arg9: memref<2x16x64xf32, #tpu.memory_space<vmem>>, %arg10: memref<2x10x64xf32, #tpu.memory_space<vmem>>) attributes {dimension_semantics = [#tpu.dimension_semantics<parallel>], iteration_bounds = array<i64: 1>, scalar_prefetch = 0 : i64, scratch_operands = 2 : i64, tpu.core_type = #tpu.core_type<tc>, window_params = [{transform_indices = @transform_0, window_bounds = array<i64: 2, 18, 128>}, {pipeline_mode = #tpu.pipeline_mode<synchronous>, transform_indices = @transform_1, window_bounds = array<i64: 384, 64>}, {pipeline_mode = #tpu.pipeline_mode<synchronous>, transform_indices = @transform_2, window_bounds = array<i64: 1, 64>}, {pipeline_mode = #tpu.pipeline_mode<synchronous>, transform_indices = @transform_3, window_bounds = array<i64: 192, 128>}, {pipeline_mode = #tpu.pipeline_mode<synchronous>, transform_indices = @transform_4, window_bounds = array<i64: 1, 128>}, {pipeline_mode = #tpu.pipeline_mode<synchronous>, transform_indices = @transform_5, window_bounds = array<i64: 128, 128>}, {pipeline_mode = #tpu.pipeline_mode<synchronous>, transform_indices = @transform_6, window_bounds = array<i64: 1, 128>}, {transform_indices = @transform_7, window_bounds = array<i64: 2, 128>}]} {
    %c0 = arith.constant 0 : index
    %c0_0 = arith.constant 0 : index
    %c0_1 = arith.constant 0 : index
    %0 = vector.load %arg1[%c0, %c0_0, %c0_1] : memref<2x18x128xbf16, #tpu.memory_space<vmem>>, vector<2x16x128xbf16>
    %c0_2 = arith.constant 0 : index
    %c1 = arith.constant 1 : index
    %c0_3 = arith.constant 0 : index
    %1 = vector.load %arg1[%c0_2, %c1, %c0_3] : memref<2x18x128xbf16, #tpu.memory_space<vmem>>, vector<2x16x128xbf16>
    %c0_4 = arith.constant 0 : index
    %c2 = arith.constant 2 : index
    %c0_5 = arith.constant 0 : index
    %2 = vector.load %arg1[%c0_4, %c2, %c0_5] : memref<2x18x128xbf16, #tpu.memory_space<vmem>>, vector<2x16x128xbf16>
    %3 = tpu.concatenate %0, %1, %2 in 2 : vector<2x16x128xbf16>, vector<2x16x128xbf16>, vector<2x16x128xbf16> -> vector<2x16x384xbf16>
    %4 = vector.shape_cast %3 : vector<2x16x384xbf16> to vector<32x384xbf16>
    %c0_6 = arith.constant 0 : index
    %c0_7 = arith.constant 0 : index
    %5 = vector.load %arg2[%c0_6, %c0_7] : memref<384x64xbf16, #tpu.memory_space<vmem>>, vector<384x64xbf16>
    %cst = arith.constant dense<0.000000e+00> : vector<32x64xf32>
    %6 = tpu.matmul %4, %5, %cst {dimension_numbers = #tpu.dot_dimension_numbers<[1], [0], [0], [1], [0, 0, 1, 1], [], []>} : vector<32x384xbf16>, vector<384x64xbf16>, vector<32x64xf32> -> vector<32x64xf32>
    %c0_8 = arith.constant 0 : index
    %c0_9 = arith.constant 0 : index
    %7 = vector.load %arg3[%c0_8, %c0_9] : memref<1x64xf32, #tpu.memory_space<vmem>>, vector<1x64xf32>
    %8 = vector.broadcast %7 : vector<1x64xf32> to vector<32x64xf32>
    %9 = arith.addf %6, %8 : vector<32x64xf32>
    %10 = vector.shape_cast %9 : vector<32x64xf32> to vector<2x16x64xf32>
    %c0_10 = arith.constant 0 : index
    %c0_11 = arith.constant 0 : index
    %c0_12 = arith.constant 0 : index
    %11 = vector.load %arg9[%c0_10, %c0_11, %c0_12] : memref<2x16x64xf32, #tpu.memory_space<vmem>>, vector<2x16x64xf32>
    tpu.vector_store %arg9[%c0_10, %c0_11, %c0_12], %10 {strides = array<i32>} : memref<2x16x64xf32, #tpu.memory_space<vmem>>, vector<2x16x64xf32>,
    %c0_13 = arith.constant 0 : index
    %c0_14 = arith.constant 0 : index
    %c0_15 = arith.constant 0 : index
    %12 = tpu.strided_load %arg9[%c0_13, %c0_14, %c0_15] {strides = array<i32: 1, 2, 1>} : memref<2x16x64xf32, #tpu.memory_space<vmem>>, vector<2x6x64xf32>
    %c0_16 = arith.constant 0 : index
    %c1_17 = arith.constant 1 : index
    %c0_18 = arith.constant 0 : index
    %13 = tpu.strided_load %arg9[%c0_16, %c1_17, %c0_18] {strides = array<i32: 1, 2, 1>} : memref<2x16x64xf32, #tpu.memory_space<vmem>>, vector<2x6x64xf32>
    %14 = arith.maximumf %12, %13 : vector<2x6x64xf32>
    %c0_19 = arith.constant 0 : index
    %c2_20 = arith.constant 2 : index
    %c0_21 = arith.constant 0 : index
    %15 = tpu.strided_load %arg9[%c0_19, %c2_20, %c0_21] {strides = array<i32: 1, 2, 1>} : memref<2x16x64xf32, #tpu.memory_space<vmem>>, vector<2x6x64xf32>
    %16 = arith.maximumf %14, %15 : vector<2x6x64xf32>
    %c0_22 = arith.constant 0 : index
    %c0_23 = arith.constant 0 : index
    %c0_24 = arith.constant 0 : index
    %17 = vector.load %arg10[%c0_22, %c0_23, %c0_24] : memref<2x10x64xf32, #tpu.memory_space<vmem>>, vector<2x6x64xf32>
    tpu.vector_store %arg10[%c0_22, %c0_23, %c0_24], %16 {strides = array<i32>} : memref<2x10x64xf32, #tpu.memory_space<vmem>>, vector<2x6x64xf32>,
    %cst_25 = arith.constant 0.000000e+00 : f32
    %18 = vector.broadcast %cst_25 : f32 to vector<2x4x64xf32>
    %c0_26 = arith.constant 0 : index
    %c6 = arith.constant 6 : index
    %c0_27 = arith.constant 0 : index
    %19 = vector.load %arg10[%c0_26, %c6, %c0_27] : memref<2x10x64xf32, #tpu.memory_space<vmem>>, vector<2x4x64xf32>
    tpu.vector_store %arg10[%c0_26, %c6, %c0_27], %18 {strides = array<i32>} : memref<2x10x64xf32, #tpu.memory_space<vmem>>, vector<2x4x64xf32>,
    %c0_28 = arith.constant 0 : index
    %c0_29 = arith.constant 0 : index
    %c0_30 = arith.constant 0 : index
    %20 = vector.load %arg10[%c0_28, %c0_29, %c0_30] : memref<2x10x64xf32, #tpu.memory_space<vmem>>, vector<2x8x64xf32>
    %c0_31 = arith.constant 0 : index
    %c1_32 = arith.constant 1 : index
    %c0_33 = arith.constant 0 : index
    %21 = vector.load %arg10[%c0_31, %c1_32, %c0_33] : memref<2x10x64xf32, #tpu.memory_space<vmem>>, vector<2x8x64xf32>
    %c0_34 = arith.constant 0 : index
    %c2_35 = arith.constant 2 : index
    %c0_36 = arith.constant 0 : index
    %22 = vector.load %arg10[%c0_34, %c2_35, %c0_36] : memref<2x10x64xf32, #tpu.memory_space<vmem>>, vector<2x8x64xf32>
    %23 = tpu.concatenate %20, %21, %22 in 2 : vector<2x8x64xf32>, vector<2x8x64xf32>, vector<2x8x64xf32> -> vector<2x8x192xf32>
    %24 = arith.truncf %23 : vector<2x8x192xf32> to vector<2x8x192xbf16>
    %25 = vector.shape_cast %24 : vector<2x8x192xbf16> to vector<16x192xbf16>
    %c0_37 = arith.constant 0 : index
    %c0_38 = arith.constant 0 : index
    %26 = vector.load %arg4[%c0_37, %c0_38] : memref<192x128xbf16, #tpu.memory_space<vmem>>, vector<192x128xbf16>
    %cst_39 = arith.constant dense<0.000000e+00> : vector<16x128xf32>
    %27 = tpu.matmul %25, %26, %cst_39 {dimension_numbers = #tpu.dot_dimension_numbers<[1], [0], [0], [1], [0, 0, 1, 1], [], []>} : vector<16x192xbf16>, vector<192x128xbf16>, vector<16x128xf32> -> vector<16x128xf32>
    %c0_40 = arith.constant 0 : index
    %c0_41 = arith.constant 0 : index
    %28 = vector.load %arg5[%c0_40, %c0_41] : memref<1x128xf32, #tpu.memory_space<vmem>>, vector<1x128xf32>
    %29 = vector.broadcast %28 : vector<1x128xf32> to vector<16x128xf32>
    %30 = arith.addf %27, %29 : vector<16x128xf32>
    %31 = vector.shape_cast %30 : vector<16x128xf32> to vector<2x8x128xf32>
    %32 = vector.extract_strided_slice %31 {offsets = [0, 0, 0], sizes = [2, 4, 128], strides = [1, 1, 1]} : vector<2x8x128xf32> to vector<2x4x128xf32>
    %cst_42 = arith.constant dense<0xFF800000> : vector<2x128xf32>
    %33 = vector.multi_reduction <maximumf>, %32, %cst_42 [1] : vector<2x4x128xf32> to vector<2x128xf32>
    %c0_43 = arith.constant 0 : index
    %c0_44 = arith.constant 0 : index
    %34 = vector.load %arg6[%c0_43, %c0_44] : memref<128x128xf32, #tpu.memory_space<vmem>>, vector<128x128xf32>
    %cst_45 = arith.constant dense<0.000000e+00> : vector<2x128xf32>
    %35 = tpu.matmul %33, %34, %cst_45 {dimension_numbers = #tpu.dot_dimension_numbers<[1], [0], [0], [1], [0, 0, 1, 1], [], []>} : vector<2x128xf32>, vector<128x128xf32>, vector<2x128xf32> -> vector<2x128xf32>
    %c0_46 = arith.constant 0 : index
    %c0_47 = arith.constant 0 : index
    %36 = vector.load %arg7[%c0_46, %c0_47] : memref<1x128xf32, #tpu.memory_space<vmem>>, vector<1x128xf32>
    %37 = vector.broadcast %36 : vector<1x128xf32> to vector<2x128xf32>
    %38 = arith.addf %35, %37 : vector<2x128xf32>
    %c0_48 = arith.constant 0 : index
    %c0_49 = arith.constant 0 : index
    %39 = vector.load %arg8[%c0_48, %c0_49] : memref<2x128xf32, #tpu.memory_space<vmem>>, vector<2x128xf32>
    tpu.vector_store %arg8[%c0_48, %c0_49], %38 {strides = array<i32>} : memref<2x128xf32, #tpu.memory_space<vmem>>, vector<2x128xf32>,
    return
  }
  func.func @transform_0(%arg0: i32) -> (i32, i32, i32) {
    %c0_i32 = arith.constant 0 : i32
    %c0_i32_0 = arith.constant 0 : i32
    %c0_i32_1 = arith.constant 0 : i32
    return %arg0, %c0_i32, %c0_i32_0 : i32, i32, i32
  }
  func.func @transform_1(%arg0: i32) -> (i32, i32) {
    %c0_i32 = arith.constant 0 : i32
    %c0_i32_0 = arith.constant 0 : i32
    %c0_i32_1 = arith.constant 0 : i32
    return %c0_i32, %c0_i32_0 : i32, i32
  }
  func.func @transform_2(%arg0: i32) -> (i32, i32) {
    %c0_i32 = arith.constant 0 : i32
    %c0_i32_0 = arith.constant 0 : i32
    %c0_i32_1 = arith.constant 0 : i32
    return %c0_i32, %c0_i32_0 : i32, i32
  }
  func.func @transform_3(%arg0: i32) -> (i32, i32) {
    %c0_i32 = arith.constant 0 : i32
    %c0_i32_0 = arith.constant 0 : i32
    %c0_i32_1 = arith.constant 0 : i32
    return %c0_i32, %c0_i32_0 : i32, i32
  }
  func.func @transform_4(%arg0: i32) -> (i32, i32) {
    %c0_i32 = arith.constant 0 : i32
    %c0_i32_0 = arith.constant 0 : i32
    %c0_i32_1 = arith.constant 0 : i32
    return %c0_i32, %c0_i32_0 : i32, i32
  }
  func.func @transform_5(%arg0: i32) -> (i32, i32) {
    %c0_i32 = arith.constant 0 : i32
    %c0_i32_0 = arith.constant 0 : i32
    %c0_i32_1 = arith.constant 0 : i32
    return %c0_i32, %c0_i32_0 : i32, i32
  }
  func.func @transform_6(%arg0: i32) -> (i32, i32) {
    %c0_i32 = arith.constant 0 : i32
    %c0_i32_0 = arith.constant 0 : i32
    %c0_i32_1 = arith.constant 0 : i32
    return %c0_i32, %c0_i32_0 : i32, i32
  }
  func.func @transform_7(%arg0: i32) -> (i32, i32) {
    %c0_i32 = arith.constant 0 : i32
    %c0_i32_0 = arith.constant 0 : i32
    return %arg0, %c0_i32 : i32, i32
  }
}

</mosaic_0001>

<llo_original>
// kernel: tpu_custom_call.1
$region0: #{tpu_custom_call.1}
  #allocation0 [shape = 'u32[]', space=smem, size = 0x4, offset = 0x4, fixed_abs, tag = 'smem constant byte address 0x4 - core index']
  #allocation1 [shape = 'u32[144,128]{1,0:T(1,128)}', space=vmem, size = 0x12000, scoped, tag = 'internal scratch']
  #allocation2 [shape = 'f32[2,16,64]{2,1,0:T(8,128)}', space=vmem, size = 0x4000, scoped, tag = 'scratch operand']
  #allocation3 [shape = 'f32[2,10,64]{2,1,0:T(8,128)}', space=vmem, size = 0x4000, scoped, tag = 'scratch operand']
  %s0 = inlined_call_operand.vmem [shape: bf16[2,18,128], index: 0, kind: input, shape index: {}]
  %s1 = inlined_call_operand.vmem [shape: bf16[384,64], index: 1, kind: input, shape index: {}]
  %s2 = inlined_call_operand.vmem [shape: f32[1,64], index: 2, kind: input, shape index: {}]
  %s3 = inlined_call_operand.vmem [shape: bf16[192,128], index: 3, kind: input, shape index: {}]
  %s4 = inlined_call_operand.vmem [shape: f32[1,128], index: 4, kind: input, shape index: {}]
  %s5 = inlined_call_operand.vmem [shape: f32[128,128], index: 5, kind: input, shape index: {}]
  %s6 = inlined_call_operand.vmem [shape: f32[1,128], index: 6, kind: input, shape index: {}]
  %s7 = inlined_call_operand.hbm [shape: f32[2,128], index: 7, kind: output, shape index: {}]
  %s8 = sld [smem:[#allocation0]]
  $region38: #{tpu_custom_call.1} parent=0
    _
  %s10 = ssub.s32 1, %s8
  %s11 = scalar_select 0, %s10, %s8
  $region1: #{tpu_custom_call.1} parent=0
    #allocation4 [shape = 'u8[1024]{0}', space=vmem, size = 0x400, scoped, tag = 'output window, operand 0, single buffered']
    #allocation5 [shape = 's32[1]{0}', space=sflag, size = 0x4, scoped, tag = 'scoped memory for tpu_custom_call.1']
    %12 = vsyncpa [#allocation5], 0
    // Predicated region
    $region2: #{tpu_custom_call.1} parent=1 // pred_check
      _
    $region3: #{tpu_custom_call.1} parent=1 // pred_check_branch
      %14 = sbr.rel (0) target = $region5
    $region4: #{tpu_custom_call.1} parent=1 // pred_region
      _
    $region5: #{tpu_custom_call.1} parent=1 // pred_fallthru
      _
    // Predicated region
    $region6: #{tpu_custom_call.1} parent=1 // pred_check
      _
    $region7: #{tpu_custom_call.1} parent=1 // pred_check_branch
      %16 = sbr.rel (0) target = $region9
    $region8: #{tpu_custom_call.1} parent=1 // pred_region
      _
    $region9: #{tpu_custom_call.1} parent=1 // pred_fallthru
      _
    // Predicated region
    $region10: #{tpu_custom_call.1} parent=1 // pred_check
      _
    $region11: #{tpu_custom_call.1} parent=1 // pred_check_branch
      %18 = sbr.rel (0) target = $region13
    $region12: #{tpu_custom_call.1} parent=1 // pred_region
      _
    $region13: #{tpu_custom_call.1} parent=1 // pred_fallthru
      _
    // Predicated region
    $region14: #{tpu_custom_call.1} parent=1 // pred_check
      _
    $region15: #{tpu_custom_call.1} parent=1 // pred_check_branch
      %20 = sbr.rel (0) target = $region17
    $region16: #{tpu_custom_call.1} parent=1 // pred_region
      _
    $region17: #{tpu_custom_call.1} parent=1 // pred_fallthru
      _
    // Predicated region
    $region18: #{tpu_custom_call.1} parent=1 // pred_check
      _
    $region19: #{tpu_custom_call.1} parent=1 // pred_check_branch
      %22 = sbr.rel (0) target = $region21
    $region20: #{tpu_custom_call.1} parent=1 // pred_region
      _
    $region21: #{tpu_custom_call.1} parent=1 // pred_fallthru
      _
    // Predicated region
    $region22: #{tpu_custom_call.1} parent=1 // pred_check
      _
    $region23: #{tpu_custom_call.1} parent=1 // pred_check_branch
      %24 = sbr.rel (0) target = $region25
    $region24: #{tpu_custom_call.1} parent=1 // pred_region
      _
    $region25: #{tpu_custom_call.1} parent=1 // pred_fallthru
      _
    // Predicated region
    $region26: #{tpu_custom_call.1} parent=1 // pred_check
      _
    $region27: #{tpu_custom_call.1} parent=1 // pred_check_branch
      %26 = sbr.rel (0) target = $region29
    $region28: #{tpu_custom_call.1} parent=1 // pred_region
      _
    $region29: #{tpu_custom_call.1} parent=1 // pred_fallthru
      _
    %v28 = vld [vmem:[%s0] sm:$0xf]
    %v29 = vld [vmem:[%s0 + $0x4] sm:$0xf]
    %v30 = vld [vmem:[%s0 + $0xc] sm:$0xf]
    %v31 = vld [vmem:[%s0 + $0x10] sm:$0xf]
    %v32 = vld [vmem:[%s0 + $0x8] sm:$0x1]
    %v33 = vld [vmem:[%s0 + $0x14] sm:$0x1]
    %v34 = vld [vmem:[%s0] sm:$0xe]
    %v35 = vld [vmem:[%s0 + $0xc] sm:$0xe]
    %v40 = vunpack.c.l.b16 %v28
    %v41 = vunpack.c.l.b16 %v29
    %v42 = vunpack.c.l.b16 %v30
    %v43 = vunpack.c.l.b16 %v31
    %v44 = vpack.c.b16 %v41, %v40
    %v45 = vpack.c.b16 %v43, %v42
    %v50 = vunpack.c.l.b16 %v32
    %v51 = vunpack.c.l.b16 %v33
    %v52 = vpack.c.b16 %v50, %v50
    %v53 = vpack.c.b16 %v51, %v51
    %vm54 = vsmask.f32 7424
    %v56 = vshrl.u32 %v44, 16
    %v58 = vshll.u32 %v44, 16
    %v60 = vrot.slane %v58, 1
    %v61 = vor.u32 %v56, %v60
    %v63 = vshll.u32 %v52, 16
    %v65 = vrot.slane %v63, 1
    %v66 = vsel %vm54, %v61, %v65
    %v68 = vshrl.u32 %v45, 16
    %v70 = vshll.u32 %v45, 16
    %v72 = vrot.slane %v70, 1
    %v73 = vor.u32 %v68, %v72
    %v75 = vshll.u32 %v53, 16
    %v77 = vrot.slane %v75, 1
    %v78 = vsel %vm54, %v73, %v77
    %v83 = vunpack.c.l.b16 %v34
    %v84 = vunpack.c.l.b16 %v35
    %v85 = vpack.c.b16 %v41, %v83
    %v86 = vpack.c.b16 %v43, %v84
    %vm87 = vcmask 1046528
    %v88 = vrot.slane %v85, 1
    %v89 = vrot.slane %v52, 1
    %v90 = vsel %vm87, %v88, %v89
    %v91 = vrot.slane %v86, 1
    %v92 = vrot.slane %v53, 1
    %v93 = vsel %vm87, %v91, %v92
    %v96 = vld [vmem:[%s1] sm:$0xf]
    %v97 = vld [vmem:[%s1 + $0x4] sm:$0xf]
    %v98 = vld [vmem:[%s1 + $0x8] sm:$0xf]
    %v99 = vld [vmem:[%s1 + $0xc] sm:$0xf]
    %v100 = vld [vmem:[%s1 + $0x10] sm:$0xf]
    %v101 = vld [vmem:[%s1 + $0x14] sm:$0xf]
    %v102 = vld [vmem:[%s1 + $0x18] sm:$0xf]
    %v103 = vld [vmem:[%s1 + $0x1c] sm:$0xf]
    %v104 = vld [vmem:[%s1 + $0x20] sm:$0xf]
    %v105 = vld [vmem:[%s1 + $0x24] sm:$0xf]
    %v106 = vld [vmem:[%s1 + $0x28] sm:$0xf]
    %v107 = vld [vmem:[%s1 + $0x2c] sm:$0xf]
    %v108 = vld [vmem:[%s1 + $0x30] sm:$0xf]
    %v109 = vld [vmem:[%s1 + $0x34] sm:$0xf]
    %v110 = vld [vmem:[%s1 + $0x38] sm:$0xf]
    %v111 = vld [vmem:[%s1 + $0x3c] sm:$0xf]
    %v112 = vld [vmem:[%s1 + $0x40] sm:$0xf]
    %v113 = vld [vmem:[%s1 + $0x44] sm:$0xf]
    %v114 = vld [vmem:[%s1 + $0x48] sm:$0xf]
    %v115 = vld [vmem:[%s1 + $0x4c] sm:$0xf]
    %v116 = vld [vmem:[%s1 + $0x50] sm:$0xf]
    %v117 = vld [vmem:[%s1 + $0x54] sm:$0xf]
    %v118 = vld [vmem:[%s1 + $0x58] sm:$0xf]
    %v119 = vld [vmem:[%s1 + $0x5c] sm:$0xf]
    %v120 = vld [vmem:[%s1 + $0x60] sm:$0xf]
    %v121 = vld [vmem:[%s1 + $0x64] sm:$0xf]
    %v122 = vld [vmem:[%s1 + $0x68] sm:$0xf]
    %v123 = vld [vmem:[%s1 + $0x6c] sm:$0xf]
    %v124 = vld [vmem:[%s1 + $0x70] sm:$0xf]
    %v125 = vld [vmem:[%s1 + $0x74] sm:$0xf]
    %v126 = vld [vmem:[%s1 + $0x78] sm:$0xf]
    %v127 = vld [vmem:[%s1 + $0x7c] sm:$0xf]
    %v128 = vld [vmem:[%s1 + $0x80] sm:$0xf]
    %v129 = vld [vmem:[%s1 + $0x84] sm:$0xf]
    %v130 = vld [vmem:[%s1 + $0x88] sm:$0xf]
    %v131 = vld [vmem:[%s1 + $0x8c] sm:$0xf]
    %v132 = vld [vmem:[%s1 + $0x90] sm:$0xf]
    %v133 = vld [vmem:[%s1 + $0x94] sm:$0xf]
    %v134 = vld [vmem:[%s1 + $0x98] sm:$0xf]
    %v135 = vld [vmem:[%s1 + $0x9c] sm:$0xf]
    %v136 = vld [vmem:[%s1 + $0xa0] sm:$0xf]
    %v137 = vld [vmem:[%s1 + $0xa4] sm:$0xf]
    %v138 = vld [vmem:[%s1 + $0xa8] sm:$0xf]
    %v139 = vld [vmem:[%s1 + $0xac] sm:$0xf]
    %v140 = vld [vmem:[%s1 + $0xb0] sm:$0xf]
    %v141 = vld [vmem:[%s1 + $0xb4] sm:$0xf]
    %v142 = vld [vmem:[%s1 + $0xb8] sm:$0xf]
    %v143 = vld [vmem:[%s1 + $0xbc] sm:$0xf]
    %v144 = vld [vmem:[%s2] sm:$0x1]
    %v146 = vlaneseq
    %v147 = vshrl.u32 %v146, 7
    %v148 = vsub.s32 0, %v147
    %v149 = vrot.slane %v144, %v148
    %v199 = vunpack.c.l.b16 %v96
    %v200 = vunpack.c.l.b16 %v97
    %v201 = vunpack.c.l.b16 %v98
    %v202 = vunpack.c.l.b16 %v99
    %v203 = vunpack.c.l.b16 %v100
    %v204 = vunpack.c.l.b16 %v101
    %v205 = vunpack.c.l.b16 %v102
    %v206 = vunpack.c.l.b16 %v103
    %v207 = vunpack.c.l.b16 %v104
    %v208 = vunpack.c.l.b16 %v105
    %v209 = vunpack.c.l.b16 %v106
    %v210 = vunpack.c.l.b16 %v107
    %v211 = vunpack.c.l.b16 %v108
    %v212 = vunpack.c.l.b16 %v109
    %v213 = vunpack.c.l.b16 %v110
    %v214 = vunpack.c.l.b16 %v111
    %v215 = vunpack.c.l.b16 %v112
    %v216 = vunpack.c.l.b16 %v113
    %v217 = vunpack.c.l.b16 %v114
    %v218 = vunpack.c.l.b16 %v115
    %v219 = vunpack.c.l.b16 %v116
    %v220 = vunpack.c.l.b16 %v117
    %v221 = vunpack.c.l.b16 %v118
    %v222 = vunpack.c.l.b16 %v119
    %v223 = vunpack.c.l.b16 %v120
    %v224 = vunpack.c.l.b16 %v121
    %v225 = vunpack.c.l.b16 %v122
    %v226 = vunpack.c.l.b16 %v123
    %v227 = vunpack.c.l.b16 %v124
    %v228 = vunpack.c.l.b16 %v125
    %v229 = vunpack.c.l.b16 %v126
    %v230 = vunpack.c.l.b16 %v127
    %v231 = vunpack.c.l.b16 %v128
    %v232 = vunpack.c.l.b16 %v129
    %v233 = vunpack.c.l.b16 %v130
    %v234 = vunpack.c.l.b16 %v131
    %v235 = vunpack.c.l.b16 %v132
    %v236 = vunpack.c.l.b16 %v133
    %v237 = vunpack.c.l.b16 %v134
    %v238 = vunpack.c.l.b16 %v135
    %v239 = vunpack.c.l.b16 %v136
    %v240 = vunpack.c.l.b16 %v137
    %v241 = vunpack.c.l.b16 %v138
    %v242 = vunpack.c.l.b16 %v139
    %v243 = vunpack.c.l.b16 %v140
    %v244 = vunpack.c.l.b16 %v141
    %v245 = vunpack.c.l.b16 %v142
    %v246 = vunpack.c.l.b16 %v143
    %v247 = vpack.c.b16 %v200, %v199
    %v248 = vpack.c.b16 %v202, %v201
    %v249 = vpack.c.b16 %v204, %v203
    %v250 = vpack.c.b16 %v206, %v205
    %v251 = vpack.c.b16 %v208, %v207
    %v252 = vpack.c.b16 %v210, %v209
    %v253 = vpack.c.b16 %v212, %v211
    %v254 = vpack.c.b16 %v214, %v213
    %v255 = vpack.c.b16 %v216, %v215
    %v256 = vpack.c.b16 %v218, %v217
    %v257 = vpack.c.b16 %v220, %v219
    %v258 = vpack.c.b16 %v222, %v221
    %v259 = vpack.c.b16 %v224, %v223
    %v260 = vpack.c.b16 %v226, %v225
    %v261 = vpack.c.b16 %v228, %v227
    %v262 = vpack.c.b16 %v230, %v229
    %v263 = vpack.c.b16 %v232, %v231
    %v264 = vpack.c.b16 %v234, %v233
    %v265 = vpack.c.b16 %v236, %v235
    %v266 = vpack.c.b16 %v238, %v237
    %v267 = vpack.c.b16 %v240, %v239
    %v268 = vpack.c.b16 %v242, %v241
    %v269 = vpack.c.b16 %v244, %v243
    %v270 = vpack.c.b16 %v246, %v245
    %295 = vmatprep.subr.bf16.mxu0 0
    %296 = vmatpush1.bf16.msra.mxu0 %v247
    %297 = vmatprep.subr.bf16.mxu0 0
    %298 = vmatpush1.bf16.msra.mxu0 %v248
    %299 = vmatprep.subr.bf16.mxu0 0
    %300 = vmatpush1.bf16.msra.mxu0 %v249
    %301 = vmatprep.subr.bf16.mxu0 0
    %302 = vmatpush1.bf16.msra.mxu0 %v250
    %303 = vmatprep.subr.bf16.mxu0 0
    %304 = vmatpush1.bf16.msra.mxu0 %v251
    %305 = vmatprep.subr.bf16.mxu0 0
    %306 = vmatpush1.bf16.msra.mxu0 %v252
    %307 = vmatprep.subr.bf16.mxu0 0
    %308 = vmatpush1.bf16.msra.mxu0 %v253
    %309 = vmatprep.subr.bf16.mxu0 0
    %310 = vmatpush1.bf16.msra.mxu0 %v254
    %311 = vmatprep.subr.bf16.mxu0 0
    %312 = vmatpush1.bf16.msra.mxu0 %v255
    %313 = vmatprep.subr.bf16.mxu0 0
    %314 = vmatpush1.bf16.msra.mxu0 %v256
    %315 = vmatprep.subr.bf16.mxu0 0
    %316 = vmatpush1.bf16.msra.mxu0 %v257
    %317 = vmatprep.subr.bf16.mxu0 0
    %318 = vmatpush1.bf16.msra.mxu0 %v258
    %319 = vmatprep.subr.bf16.mxu0 0
    %320 = vmatpush1.bf16.msra.mxu0 %v259
    %321 = vmatprep.subr.bf16.mxu0 0
    %322 = vmatpush1.bf16.msra.mxu0 %v260
    %323 = vmatprep.subr.bf16.mxu0 0
    %324 = vmatpush1.bf16.msra.mxu0 %v261
    %325 = vmatprep.subr.bf16.mxu0 0
    %326 = vmatpush1.bf16.msra.mxu0 %v262
    %327 = vmatprep.mubr.bf16.mxu0 %v66
    %328 = vmatmul.mubr.bf16.gmra.mrb[0].mxu0 %v44
    %v329 = vpop.f32.mrb[0].mxu0
    %v330 = vadd.f32 %v149, %v329
    %v331 = vpop.f32.mrb[0].mxu0
    %v332 = vpop.f32.mrb[0].mxu0
    %v333 = vadd.f32 %v149, %v332
    %v334 = vpop.f32.mrb[0].mxu0
    %335 = vmatprep.mubr.bf16.mxu0 %v78
    %336 = vmatmul.mubr.bf16.gmra.mrb[0].mxu0 %v45
    %v337 = vpop.f32.mrb[0].mxu0
    %v338 = vadd.f32 %v149, %v337
    %v339 = vpop.f32.mrb[0].mxu0
    %v340 = vpop.f32.mrb[0].mxu0
    %v341 = vadd.f32 %v149, %v340
    %v342 = vpop.f32.mrb[0].mxu0
    %343 = vdwg.mxu0
    %344 = vmatprep.subr.bf16.mxu0 0
    %345 = vmatpush1.bf16.msra.mxu0 %v263
    %346 = vmatprep.subr.bf16.mxu0 0
    %347 = vmatpush1.bf16.msra.mxu0 %v264
    %348 = vmatprep.subr.bf16.mxu0 0
    %349 = vmatpush1.bf16.msra.mxu0 %v265
    %350 = vmatprep.subr.bf16.mxu0 0
    %351 = vmatpush1.bf16.msra.mxu0 %v266
    %352 = vmatprep.subr.bf16.mxu0 0
    %353 = vmatpush1.bf16.msra.mxu0 %v267
    %354 = vmatprep.subr.bf16.mxu0 0
    %355 = vmatpush1.bf16.msra.mxu0 %v268
    %356 = vmatprep.subr.bf16.mxu0 0
    %357 = vmatpush1.bf16.msra.mxu0 %v269
    %358 = vmatprep.subr.bf16.mxu0 0
    %359 = vmatpush1.bf16.msra.mxu0 %v270
    %360 = vmatprep.subr.bf16.mxu0 0
    %361 = vmatpush1.bf16.msra.mxu0 0
    %362 = vmatprep.subr.bf16.mxu0 0
    %363 = vmatpush1.bf16.msra.mxu0 0
    %364 = vmatprep.subr.bf16.mxu0 0
    %365 = vmatpush1.bf16.msra.mxu0 0
    %366 = vmatprep.subr.bf16.mxu0 0
    %367 = vmatpush1.bf16.msra.mxu0 0
    %368 = vmatprep.subr.bf16.mxu0 0
    %369 = vmatpush1.bf16.msra.mxu0 0
    %370 = vmatprep.subr.bf16.mxu0 0
    %371 = vmatpush1.bf16.msra.mxu0 0
    %372 = vmatprep.subr.bf16.mxu0 0
    %373 = vmatpush1.bf16.msra.mxu0 0
    %374 = vmatprep.subr.bf16.mxu0 0
    %375 = vmatpush1.bf16.msra.mxu0 0
    %376 = vmatprep.mubr.bf16.mxu0 0
    %377 = vmatmul.mubr.bf16.gmra.mrb[0].mxu0 %v90
    %v378 = vpop.f32.mrb[0].mxu0
    %v379 = vadd.f32 %v330, %v378
    %v380 = vpop.f32.mrb[0].mxu0
    %v381 = vpop.f32.mrb[0].mxu0
    %v382 = vadd.f32 %v333, %v381
    %v383 = vpop.f32.mrb[0].mxu0
    %384 = vmatprep.mubr.bf16.mxu0 0
    %385 = vmatmul.mubr.bf16.gmra.mrb[0].mxu0 %v93
    %v386 = vpop.f32.mrb[0].mxu0
    %v387 = vadd.f32 %v338, %v386
    %v388 = vpop.f32.mrb[0].mxu0
    %v389 = vpop.f32.mrb[0].mxu0
    %v390 = vadd.f32 %v341, %v389
    %v391 = vpop.f32.mrb[0].mxu0
    %392 = vdwg.mxu0
    %vm393 = vcmask 523264
    %394 = vst.msk [vmem:[#allocation2] sm:$0xff] %vm393, %v379
    %395 = vst.msk [vmem:[#allocation2 + $0x8] sm:$0xff] %vm393, %v382
    %396 = vst.msk [vmem:[#allocation2 + $0x10] sm:$0xff] %vm393, %v387
    %397 = vst.msk [vmem:[#allocation2 + $0x18] sm:$0xff] %vm393, %v390
    %v398 = vld [vmem:[#allocation2] ss:$2 sm:$0x3f]
    %s399 = scalar_lea.vmem [#allocation2], 16
    %v400 = vld [vmem:[%s399] ss:$2 sm:$0x3f]
    %s401 = scalar_lea.vmem [#allocation2], 1
    %v402 = vld [vmem:[%s401] ss:$2 sm:$0x3f]
    %s403 = scalar_lea.vmem [#allocation2], 17
    %v404 = vld [vmem:[%s403] ss:$2 sm:$0x3f]
    %v405 = vmax.f32 %v398, %v402
    %v406 = vmax.f32 %v400, %v404
    %s407 = scalar_lea.vmem [#allocation2], 2
    %v408 = vld [vmem:[%s407] ss:$2 sm:$0x3f]
    %s409 = scalar_lea.vmem [#allocation2], 18
    %v410 = vld [vmem:[%s409] ss:$2 sm:$0x3f]
    %v411 = vmax.f32 %v405, %v408
    %v412 = vmax.f32 %v406, %v410
    %vm413 = vcmask 521216
    %414 = vst.msk [vmem:[#allocation3] sm:$0x3f] %vm413, %v411
    %415 = vst.msk [vmem:[#allocation3 + $0x10] sm:$0x3f] %vm413, %v412
    %vm416 = vcmask 519168
    %417 = vst.msk [vmem:[#allocation3 + $0x6] sm:$0xf] %vm416, 0.0
    %418 = vst.msk [vmem:[#allocation3 + $0x16] sm:$0xf] %vm416, 0.0
    %v419 = vld [vmem:[#allocation3] sm:$0xff]
    %v420 = vld [vmem:[#allocation3 + $0x10] sm:$0xff]
    %v421 = vld [vmem:[#allocation3 + $0x1] sm:$0xff]
    %v422 = vld [vmem:[#allocation3 + $0x11] sm:$0xff]
    %v423 = vld [vmem:[#allocation3 + $0x2] sm:$0xff]
    %v424 = vld [vmem:[#allocation3 + $0x12] sm:$0xff]
    %427 = vrot.lane.b32.xlu0 %v421, 64
    %v428 = vpop.permute.xlu0 %427
    %429 = vrot.lane.b32.xlu0 %v422, 64
    %v430 = vpop.permute.xlu0 %429
    %v433 = vsel %vm393, %v419, %v428
    %v434 = vsel %vm393, %v420, %v430
    %v435 = vpack.c.bf16 %v433, %v433
    %v436 = vpack.c.bf16 %v423, %v423
    %v437 = vpack.c.bf16 %v434, %v434
    %v438 = vpack.c.bf16 %v424, %v424
    %v443 = vunpack.c.l.b16 %v435
    %v444 = vunpack.c.l.b16 %v436
    %v445 = vunpack.c.l.b16 %v437
    %v446 = vunpack.c.l.b16 %v438
    %v447 = vld [vmem:[%s3] sm:$0xf]
    %v448 = vld [vmem:[%s3 + $0x4] sm:$0xf]
    %v449 = vld [vmem:[%s3 + $0x8] sm:$0xf]
    %v450 = vld [vmem:[%s3 + $0xc] sm:$0xf]
    %v451 = vld [vmem:[%s3 + $0x10] sm:$0xf]
    %v452 = vld [vmem:[%s3 + $0x14] sm:$0xf]
    %v453 = vld [vmem:[%s3 + $0x18] sm:$0xf]
    %v454 = vld [vmem:[%s3 + $0x1c] sm:$0xf]
    %v455 = vld [vmem:[%s3 + $0x20] sm:$0xf]
    %v456 = vld [vmem:[%s3 + $0x24] sm:$0xf]
    %v457 = vld [vmem:[%s3 + $0x28] sm:$0xf]
    %v458 = vld [vmem:[%s3 + $0x2c] sm:$0xf]
    %v459 = vld [vmem:[%s3 + $0x30] sm:$0xf]
    %v460 = vld [vmem:[%s3 + $0x34] sm:$0xf]
    %v461 = vld [vmem:[%s3 + $0x38] sm:$0xf]
    %v462 = vld [vmem:[%s3 + $0x3c] sm:$0xf]
    %v463 = vld [vmem:[%s3 + $0x40] sm:$0xf]
    %v464 = vld [vmem:[%s3 + $0x44] sm:$0xf]
    %v465 = vld [vmem:[%s3 + $0x48] sm:$0xf]
    %v466 = vld [vmem:[%s3 + $0x4c] sm:$0xf]
    %v467 = vld [vmem:[%s3 + $0x50] sm:$0xf]
    %v468 = vld [vmem:[%s3 + $0x54] sm:$0xf]
    %v469 = vld [vmem:[%s3 + $0x58] sm:$0xf]
    %v470 = vld [vmem:[%s3 + $0x5c] sm:$0xf]
    %v471 = vld [vmem:[%s4] sm:$0x1]
    %v473 = vlaneseq
    %v474 = vshrl.u32 %v473, 7
    %v475 = vsub.s32 0, %v474
    %v476 = vrot.slane %v471, %v475
    %v478 = vpack.c.b16 %v445, %v443
    %v479 = vpack.c.b16 %v446, %v444
    %v505 = vunpack.c.l.b16 %v447
    %v506 = vunpack.c.l.b16 %v448
    %v507 = vunpack.c.l.b16 %v449
    %v508 = vunpack.c.l.b16 %v450
    %v509 = vunpack.c.l.b16 %v451
    %v510 = vunpack.c.l.b16 %v452
    %v511 = vunpack.c.l.b16 %v453
    %v512 = vunpack.c.l.b16 %v454
    %v513 = vunpack.c.l.b16 %v455
    %v514 = vunpack.c.l.b16 %v456
    %v515 = vunpack.c.l.b16 %v457
    %v516 = vunpack.c.l.b16 %v458
    %v517 = vunpack.c.l.b16 %v459
    %v518 = vunpack.c.l.b16 %v460
    %v519 = vunpack.c.l.b16 %v461
    %v520 = vunpack.c.l.b16 %v462
    %v521 = vunpack.c.l.b16 %v463
    %v522 = vunpack.c.l.b16 %v464
    %v523 = vunpack.c.l.b16 %v465
    %v524 = vunpack.c.l.b16 %v466
    %v525 = vunpack.c.l.b16 %v467
    %v526 = vunpack.c.l.b16 %v468
    %v527 = vunpack.c.l.b16 %v469
    %v528 = vunpack.c.l.b16 %v470
    %v529 = vpack.c.b16 %v506, %v505
    %v530 = vpack.c.b16 %v508, %v507
    %v531 = vpack.c.b16 %v510, %v509
    %v532 = vpack.c.b16 %v512, %v511
    %v533 = vpack.c.b16 %v514, %v513
    %v534 = vpack.c.b16 %v516, %v515
    %v535 = vpack.c.b16 %v518, %v517
    %v536 = vpack.c.b16 %v520, %v519
    %v537 = vpack.c.b16 %v522, %v521
    %v538 = vpack.c.b16 %v524, %v523
    %v539 = vpack.c.b16 %v526, %v525
    %v540 = vpack.c.b16 %v528, %v527
    %v554 = vsel %vm393, %v479, 0
    %556 = vmatprep.subr.bf16.mxu0 0
    %557 = vmatpush1.bf16.msra.mxu0 %v529
    %558 = vmatprep.subr.bf16.mxu0 0
    %559 = vmatpush1.bf16.msra.mxu0 %v530
    %560 = vmatprep.subr.bf16.mxu0 0
    %561 = vmatpush1.bf16.msra.mxu0 %v531
    %562 = vmatprep.subr.bf16.mxu0 0
    %563 = vmatpush1.bf16.msra.mxu0 %v532
    %564 = vmatprep.subr.bf16.mxu0 0
    %565 = vmatpush1.bf16.msra.mxu0 %v533
    %566 = vmatprep.subr.bf16.mxu0 0
    %567 = vmatpush1.bf16.msra.mxu0 %v534
    %568 = vmatprep.subr.bf16.mxu0 0
    %569 = vmatpush1.bf16.msra.mxu0 %v535
    %570 = vmatprep.subr.bf16.mxu0 0
    %571 = vmatpush1.bf16.msra.mxu0 %v536
    %572 = vmatprep.subr.bf16.mxu0 0
    %573 = vmatpush1.bf16.msra.mxu0 %v537
    %574 = vmatprep.subr.bf16.mxu0 0
    %575 = vmatpush1.bf16.msra.mxu0 %v538
    %576 = vmatprep.subr.bf16.mxu0 0
    %577 = vmatpush1.bf16.msra.mxu0 %v539
    %578 = vmatprep.subr.bf16.mxu0 0
    %579 = vmatpush1.bf16.msra.mxu0 %v540
    %580 = vmatprep.subr.bf16.mxu0 0
    %581 = vmatpush1.bf16.msra.mxu0 0
    %582 = vmatprep.subr.bf16.mxu0 0
    %583 = vmatpush1.bf16.msra.mxu0 0
    %584 = vmatprep.subr.bf16.mxu0 0
    %585 = vmatpush1.bf16.msra.mxu0 0
    %586 = vmatprep.subr.bf16.mxu0 0
    %587 = vmatpush1.bf16.msra.mxu0 0
    %588 = vmatprep.mubr.bf16.mxu0 %v554
    %589 = vmatmul.mubr.bf16.gmra.mrb[0].mxu0 %v478
    %v590 = vpop.f32.mrb[0].mxu0
    %v591 = vadd.f32 %v476, %v590
    %v592 = vpop.f32.mrb[0].mxu0
    %v593 = vpop.f32.mrb[0].mxu0
    %v594 = vadd.f32 %v476, %v593
    %v595 = vpop.f32.mrb[0].mxu0
    %596 = vdwg.mxu0
    %vm597 = vcmask 1043456
    %v598 = vsel %vm597, %v591, -inf
    %v599 = vrot.slane %v598, 4
    %v600 = vmax.f32 %v598, %v599
    %v601 = vrot.slane %v600, 2
    %v602 = vmax.f32 %v600, %v601
    %v603 = vrot.slane %v602, 1
    %v604 = vmax.f32 %v602, %v603
    %v605 = vsel %vm597, %v594, -inf
    %v606 = vrot.slane %v605, 4
    %v607 = vmax.f32 %v605, %v606
    %v608 = vrot.slane %v607, 2
    %v609 = vmax.f32 %v607, %v608
    %v610 = vrot.slane %v609, 1
    %v611 = vmax.f32 %v609, %v610
    %v612 = vld [vmem:[%s5] sm:$0xff]
    %v613 = vld [vmem:[%s5 + $0x8] sm:$0xff]
    %v614 = vld [vmem:[%s5 + $0x10] sm:$0xff]
    %v615 = vld [vmem:[%s5 + $0x18] sm:$0xff]
    %v616 = vld [vmem:[%s5 + $0x20] sm:$0xff]
    %v617 = vld [vmem:[%s5 + $0x28] sm:$0xff]
    %v618 = vld [vmem:[%s5 + $0x30] sm:$0xff]
    %v619 = vld [vmem:[%s5 + $0x38] sm:$0xff]
    %v620 = vld [vmem:[%s5 + $0x40] sm:$0xff]
    %v621 = vld [vmem:[%s5 + $0x48] sm:$0xff]
    %v622 = vld [vmem:[%s5 + $0x50] sm:$0xff]
    %v623 = vld [vmem:[%s5 + $0x58] sm:$0xff]
    %v624 = vld [vmem:[%s5 + $0x60] sm:$0xff]
    %v625 = vld [vmem:[%s5 + $0x68] sm:$0xff]
    %v626 = vld [vmem:[%s5 + $0x70] sm:$0xff]
    %v627 = vld [vmem:[%s5 + $0x78] sm:$0xff]
    %v628 = vld [vmem:[%s6] sm:$0x1]
    %v630 = vlaneseq
    %v631 = vshrl.u32 %v630, 7
    %v632 = vsub.s32 0, %v631
    %v633 = vrot.slane %v628, %v632
    %vm637 = vcmask 1041409
    %v638 = vsel %vm637, %v611, %v604
    %640 = vmatprep.subr.mxu0 0.0
    %641 = vmatpush1.msra.mxu0 %v612
    %642 = vmatprep.subr.mxu0 0.0
    %643 = vmatpush1.msra.mxu0 %v613
    %644 = vmatprep.subr.mxu0 0.0
    %645 = vmatpush1.msra.mxu0 %v614
    %646 = vmatprep.subr.mxu0 0.0
    %647 = vmatpush1.msra.mxu0 %v615
    %648 = vmatprep.subr.mxu0 0.0
    %649 = vmatpush1.msra.mxu0 %v616
    %650 = vmatprep.subr.mxu0 0.0
    %651 = vmatpush1.msra.mxu0 %v617
    %652 = vmatprep.subr.mxu0 0.0
    %653 = vmatpush1.msra.mxu0 %v618
    %654 = vmatprep.subr.mxu0 0.0
    %655 = vmatpush1.msra.mxu0 %v619
    %656 = vmatprep.subr.mxu0 0.0
    %657 = vmatpush1.msra.mxu0 %v620
    %658 = vmatprep.subr.mxu0 0.0
    %659 = vmatpush1.msra.mxu0 %v621
    %660 = vmatprep.subr.mxu0 0.0
    %661 = vmatpush1.msra.mxu0 %v622
    %662 = vmatprep.subr.mxu0 0.0
    %663 = vmatpush1.msra.mxu0 %v623
    %664 = vmatprep.subr.mxu0 0.0
    %665 = vmatpush1.msra.mxu0 %v624
    %666 = vmatprep.subr.mxu0 0.0
    %667 = vmatpush1.msra.mxu0 %v625
    %668 = vmatprep.subr.mxu0 0.0
    %669 = vmatpush1.msra.mxu0 %v626
    %670 = vmatprep.subr.mxu0 0.0
    %671 = vmatpush1.msra.mxu0 %v627
    %672 = vmatprep.subr.mxu0 0.0
    %673 = vmatpush1.msra.mxu0 0.0
    %674 = vmatprep.subr.mxu0 0.0
    %675 = vmatpush1.msra.mxu0 0.0
    %676 = vmatprep.subr.mxu0 0.0
    %677 = vmatpush1.msra.mxu0 0.0
    %678 = vmatprep.subr.mxu0 0.0
    %679 = vmatpush1.msra.mxu0 0.0
    %680 = vmatprep.subr.mxu0 0.0
    %681 = vmatpush1.msra.mxu0 0.0
    %682 = vmatprep.subr.mxu0 0.0
    %683 = vmatpush1.msra.mxu0 0.0
    %684 = vmatprep.subr.mxu0 0.0
    %685 = vmatpush1.msra.mxu0 0.0
    %686 = vmatprep.subr.mxu0 0.0
    %687 = vmatpush1.msra.mxu0 0.0
    %688 = vmatprep.subr.mxu0 0.0
    %689 = vmatpush1.msra.mxu0 0.0
    %690 = vmatprep.subr.mxu0 0.0
    %691 = vmatpush1.msra.mxu0 0.0
    %692 = vmatprep.subr.mxu0 0.0
    %693 = vmatpush1.msra.mxu0 0.0
    %694 = vmatprep.subr.mxu0 0.0
    %695 = vmatpush1.msra.mxu0 0.0
    %696 = vmatprep.subr.mxu0 0.0
    %697 = vmatpush1.msra.mxu0 0.0
    %698 = vmatprep.subr.mxu0 0.0
    %699 = vmatpush1.msra.mxu0 0.0
    %700 = vmatprep.subr.mxu0 0.0
    %701 = vmatpush1.msra.mxu0 0.0
    %702 = vmatprep.subr.mxu0 0.0
    %703 = vmatpush1.msra.mxu0 0.0
    %704 = vmatprep.mubr.f32.mxu0 0.0
    %705 = vmatmul.mubr.f32.gmra.mrb[0].mxu0 %v638
    %v706 = vpop.f32.mrb[0].mxu0
    %v707 = vadd.f32 %v633, %v706
    %v708 = vpop.f32.mrb[0].mxu0
    %709 = vdwg.mxu0
    %710 = vst [vmem:[#allocation4] sm:$0x3] %v707
    // Predicated region
    $region30: #{tpu_custom_call.1} parent=1 // pred_check
      _
    $region31: #{tpu_custom_call.1} parent=1 // pred_check_branch
      %712 = sbr.rel (0) target = $region33
    $region32: #{tpu_custom_call.1} parent=1 // pred_region
      %s714 = ssub.s32 32, 32
      %715 = vsyncadd [#allocation5], %s714
      %s717 = sshll.u32 [#allocation4], 4
      %s718 = int_to_ptr.vmem [resolvable:$true] %s717
      %720 = dma.vmem_to_hbm [thread:$0]  %s718, 32, %s7, [#allocation5]
    $region33: #{tpu_custom_call.1} parent=1 // pred_fallthru
      _
    // Predicated region
    $region34: #{tpu_custom_call.1} parent=1 // pred_check
      _
    $region35: #{tpu_custom_call.1} parent=1 // pred_check_branch
      %722 = sbr.rel (0) target = $region37
    $region36: #{tpu_custom_call.1} parent=1 // pred_region
      %723 = dma.done [#allocation5], 32
    $region37: #{tpu_custom_call.1} parent=1 // pred_fallthru
      _
    %724 = vsyncpa [#allocation5], 1

</llo_original>
